<compile_context>
chip_gen: v7x
topology: tpu7x:2x2x1
jax: 0.10.0
libtpu: 0.0.40
codegen_flags: <defaults>
</compile_context>

<pallas_src>
import jax
import jax.numpy as jnp
from jax import lax
from jax.experimental import pallas as pl
from jax.experimental.pallas import tpu as pltpu


# ---------------------------------------------------------------------------
# Tiling helper
# ---------------------------------------------------------------------------
def _tile(dim, target, align):
    """Pick a block size: full dim if small, else a dividing multiple of
    `align` that is <= target, else fall back to the full dim (always legal
    w.r.t. the (8, 128) block-shape rule)."""
    if dim <= target:
        return dim
    t = target
    while t >= align:
        if dim % t == 0:
            return t
        t -= align
    return dim


# ---------------------------------------------------------------------------
# Pallas kernels
# ---------------------------------------------------------------------------
def _matmul_kernel(x_ref, w_ref, o_ref, acc_ref):
    @pl.when(pl.program_id(2) == 0)
    def _():
        acc_ref[...] = jnp.zeros_like(acc_ref)

    acc_ref[...] += jnp.dot(x_ref[...], w_ref[...],
                            preferred_element_type=jnp.float32)

    @pl.when(pl.program_id(2) == pl.num_programs(2) - 1)
    def _():
        o_ref[...] = acc_ref[...].astype(o_ref.dtype)


def _matmul_bias_kernel(x_ref, w_ref, b_ref, o_ref, acc_ref):
    @pl.when(pl.program_id(2) == 0)
    def _():
        acc_ref[...] = jnp.zeros_like(acc_ref)

    acc_ref[...] += jnp.dot(x_ref[...], w_ref[...],
                            preferred_element_type=jnp.float32)

    @pl.when(pl.program_id(2) == pl.num_programs(2) - 1)
    def _():
        o_ref[...] = (acc_ref[...] + b_ref[...]).astype(o_ref.dtype)


def _attn_kernel(q_ref, k_ref, v_ref, o_ref):
    # One (batch, head) pair per grid step.  Scale is already folded into q
    # (via the Wq weights).
    q = q_ref[0, 0]                   # (N, D)
    k = k_ref[0, 0]                   # (M, D)
    v = v_ref[0, 0]                   # (M, D)
    # s = q @ k.T without materializing the transpose.
    s = lax.dot_general(q, k, (((1,), (1,)), ((), ())),
                        preferred_element_type=jnp.float32)      # (N, M)
    s = s - jnp.max(s, axis=-1, keepdims=True)
    p = jnp.exp(s)
    p = p * pl.reciprocal(jnp.sum(p, axis=-1, keepdims=True), approx=True)
    o_ref[0, 0] = jnp.dot(p.astype(v.dtype), v,
                          preferred_element_type=jnp.float32).astype(o_ref.dtype)


def _attn_bias_kernel(q_ref, k_ref, v_ref, b_ref, o_ref):
    q = q_ref[0, 0]                   # (N, D)
    k = k_ref[0, 0]                   # (M, D)
    v = v_ref[0, 0]                   # (M, D)
    s = lax.dot_general(q, k, (((1,), (1,)), ((), ())),
                        preferred_element_type=jnp.float32)      # (N, M)
    s = s + b_ref[0]                  # additive mask bias (1, M) broadcasts
    s = s - jnp.max(s, axis=-1, keepdims=True)
    p = jnp.exp(s)
    p = p * pl.reciprocal(jnp.sum(p, axis=-1, keepdims=True), approx=True)
    o_ref[0, 0] = jnp.dot(p.astype(v.dtype), v,
                          preferred_element_type=jnp.float32).astype(o_ref.dtype)


# ---------------------------------------------------------------------------
# Pallas wrappers
# ---------------------------------------------------------------------------
def _pallas_matmul(x2d, wT, bias=None, *, tm=256, tn=256, tk=512):
    """y = x2d @ wT (+ bias).  Tiled (tm, tn, tk) grid, f32 VMEM accumulator."""
    R, K = x2d.shape
    K2, C = wT.shape
    assert K == K2
    bm = _tile(R, tm, 8)
    bn = _tile(C, tn, 128)
    bk = _tile(K, tk, 128)
    grid = (R // bm, C // bn, K // bk)

    itemsize = jnp.dtype(x2d.dtype).itemsize
    flops = 2 * R * C * K
    bytes_acc = (R * K + K * C + R * C) * itemsize

    in_specs = [
        pl.BlockSpec((bm, bk), lambda i, j, kk: (i, kk)),
        pl.BlockSpec((bk, bn), lambda i, j, kk: (kk, j)),
    ]
    args = [x2d, wT]
    kernel = _matmul_kernel
    if bias is not None:
        in_specs.append(pl.BlockSpec((1, bn), lambda i, j, kk: (0, j)))
        args.append(bias.reshape(1, C))
        kernel = _matmul_bias_kernel
        bytes_acc += C * itemsize

    return pl.pallas_call(
        kernel,
        grid=grid,
        in_specs=in_specs,
        out_specs=pl.BlockSpec((bm, bn), lambda i, j, kk: (i, j)),
        out_shape=jax.ShapeDtypeStruct((R, C), x2d.dtype),
        scratch_shapes=[pltpu.VMEM((bm, bn), jnp.float32)],
        compiler_params=pltpu.CompilerParams(
            dimension_semantics=("parallel", "parallel", "arbitrary"),
            vmem_limit_bytes=48 * 1024 * 1024),
        cost_estimate=pl.CostEstimate(flops=flops, transcendentals=0,
                                      bytes_accessed=bytes_acc),
    )(*args)


def _pallas_attention(q, k, v, bias=None):
    """q: (B, H, N, D); k, v: (B, H, M, D); bias: (B, 1, M) additive or None.

    One (batch, head) pair per grid step; both axes are "parallel"."""
    B, H, N, D = q.shape
    M = k.shape[2]

    in_specs = [
        pl.BlockSpec((1, 1, N, D), lambda b, h: (b, h, 0, 0)),
        pl.BlockSpec((1, 1, M, D), lambda b, h: (b, h, 0, 0)),
        pl.BlockSpec((1, 1, M, D), lambda b, h: (b, h, 0, 0)),
    ]
    args = [q, k, v]
    kernel = _attn_kernel
    if bias is not None:
        in_specs.append(pl.BlockSpec((1, 1, M), lambda b, h: (b, 0, 0)))
        args.append(bias)
        kernel = _attn_bias_kernel

    itemsize = jnp.dtype(q.dtype).itemsize
    flops = 4 * B * H * N * M * D
    bytes_acc = (2 * B * H * N * D + 2 * B * H * M * D) * itemsize
    transc = B * H * N * M

    return pl.pallas_call(
        kernel,
        grid=(B, H),
        in_specs=in_specs,
        out_specs=pl.BlockSpec((1, 1, N, D), lambda b, h: (b, h, 0, 0)),
        out_shape=jax.ShapeDtypeStruct((B, H, N, D), q.dtype),
        compiler_params=pltpu.CompilerParams(
            dimension_semantics=("parallel", "parallel"),
            vmem_limit_bytes=48 * 1024 * 1024),
        cost_estimate=pl.CostEstimate(flops=flops, transcendentals=transc,
                                      bytes_accessed=bytes_acc),
    )(*args)


# ---------------------------------------------------------------------------
# Module
# ---------------------------------------------------------------------------
class CrossAttentionPallas:
    def __init__(self, query_dim, context_dim=None, heads=8, dim_head=64,
                 dropout=0.0, key=None):
        inner_dim = dim_head * heads
        context_dim = query_dim if context_dim is None else context_dim
        self.scale = float(dim_head) ** (-0.5)
        self.heads = heads
        self.dim_head = dim_head
        self.query_dim = query_dim
        self.context_dim = context_dim
        # TODO(synk): Dropout is identity at eval / p=0.0; not implemented.
        key = jax.random.PRNGKey(0) if key is None else key
        k0, k1, k2, k3, k4 = jax.random.split(key, 5)
        # PyTorch Linear weight layout: (out_features, in_features)
        self.Wq = 0.02 * jax.random.normal(k0, (inner_dim, query_dim), jnp.float32)
        self.Wk = 0.02 * jax.random.normal(k1, (inner_dim, context_dim), jnp.float32)
        self.Wv = 0.02 * jax.random.normal(k2, (inner_dim, context_dim), jnp.float32)
        self.Wo = 0.02 * jax.random.normal(k3, (query_dim, inner_dim), jnp.float32)
        self.bo = 0.02 * jax.random.normal(k4, (query_dim,), jnp.float32)

        # Host-side precomputed, transposed weights for the kernels.
        # Softmax scale is folded into Wq once (scale*q @ k.T == scale*(q@k.T)).
        self.WqT_s = (self.scale * self.Wq).T                       # (Cq, inner)
        self.WkvT = jnp.concatenate([self.Wk, self.Wv], axis=0).T   # (Cc, 2*inner)
        if context_dim == query_dim:
            self.WqkvT = jnp.concatenate(
                [self.scale * self.Wq, self.Wk, self.Wv], axis=0).T  # (Cq, 3*inner)
        else:
            self.WqkvT = None
        self.WoT = self.Wo.T                                        # (inner, Cq)

    def __call__(self, x, context=None, mask=None):
        B, N, _ = x.shape
        h, d = self.heads, self.dim_head
        inner = h * d

        if context is None and self.WqkvT is not None:
            # Self-attention: fused QKV projection (single tiled matmul).
            M = N
            qkv = _pallas_matmul(x.reshape(B * N, -1), self.WqkvT)   # (B*N, 3*inner)
            q = qkv[:, :inner]
            k = qkv[:, inner:2 * inner]
            v = qkv[:, 2 * inner:]
            k = k.reshape(B, M, h, d)
            v = v.reshape(B, M, h, d)
        else:
            ctx = x if context is None else context
            M = ctx.shape[1]
            q = _pallas_matmul(x.reshape(B * N, -1), self.WqT_s)     # (B*N, inner)
            kv = _pallas_matmul(ctx.reshape(B * M, -1), self.WkvT)   # (B*M, 2*inner)
            k = kv[:, :inner].reshape(B, M, h, d)
            v = kv[:, inner:].reshape(B, M, h, d)

        # rearrange 'b n (h d) -> b h n d'
        q = q.reshape(B, N, h, d).transpose(0, 2, 1, 3)
        k = k.transpose(0, 2, 1, 3)
        v = v.transpose(0, 2, 1, 3)

        bias = None
        if mask is not None:
            # 'b ... -> b (...)' then additive bias: 0 for keep, -1e30 for mask.
            m = mask.reshape(B, 1, -1).astype(jnp.float32)           # (B, 1, M)
            bias = (m - 1.0) * 1e30

        out = _pallas_attention(q, k, v, bias)                       # (B, H, N, D)

        # rearrange 'b h n d -> (b n) (h d)'
        out = out.transpose(0, 2, 1, 3).reshape(B * N, inner)

        # to_out: Linear(inner_dim -> query_dim) + Dropout(identity)
        y = _pallas_matmul(out, self.WoT, bias=self.bo)
        return y.reshape(B, N, self.query_dim)


# ---------------------------------------------------------------------------
# Pure-JAX reference (for verification only)
# ---------------------------------------------------------------------------
def _reference(mod, x, context=None, mask=None):
    B, N, _ = x.shape
    h, d = mod.heads, mod.dim_head
    ctx = x if context is None else context
    M = ctx.shape[1]
    q = (x @ mod.Wq.T).reshape(B, N, h, d).transpose(0, 2, 1, 3).reshape(B * h, N, d)
    k = (ctx @ mod.Wk.T).reshape(B, M, h, d).transpose(0, 2, 1, 3).reshape(B * h, M, d)
    v = (ctx @ mod.Wv.T).reshape(B, M, h, d).transpose(0, 2, 1, 3).reshape(B * h, M, d)
    sim = jnp.einsum("bid,bjd->bij", q, k) * mod.scale
    if mask is not None:
        m = mask.reshape(B, -1)
        m = jnp.repeat(m, h, axis=0)[:, None, :]
        sim = jnp.where(m, sim, -jnp.finfo(sim.dtype).max)
    attn = jax.nn.softmax(sim, axis=-1)
    out = jnp.einsum("bij,bjd->bid", attn, v)
    out = out.reshape(B, h, N, d).transpose(0, 2, 1, 3).reshape(B, N, h * d)
    return out @ mod.Wo.T + mod.bo


# ---------------------------------------------------------------------------
# Main
# ---------------------------------------------------------------------------
if __name__ == "__main__":
    B, N, M = 2, 16, 8
    query_dim, context_dim = 32, 32
    heads, dim_head = 4, 16

    root = jax.random.PRNGKey(0)
    k_param, k_x, k_ctx, k_mask = jax.random.split(root, 4)

    mod = CrossAttentionPallas(query_dim, context_dim=context_dim,
                               heads=heads, dim_head=dim_head, key=k_param)

    x = jax.random.normal(k_x, (B, N, query_dim), jnp.float32)
    context = jax.random.normal(k_ctx, (B, M, context_dim), jnp.float32)
    mask = jax.random.bernoulli(k_mask, 0.7, (B, M))
    mask = mask.at[:, 0].set(True)  # keep at least one valid key per row

    # Self-attention path (context=None, no mask) — uses fused QKV matmul.
    y_self = mod(x)
    y_self = jax.block_until_ready(y_self)

    # Cross-attention path with mask — q matmul + fused KV matmul.
    y_cross = mod(x, context=context, mask=mask)
    y_cross = jax.block_until_ready(y_cross)

    # Verify against pure-JAX reference.
    ref_self = _reference(mod, x)
    ref_cross = _reference(mod, x, context=context, mask=mask)
    assert jnp.allclose(y_self, ref_self, atol=2e-2, rtol=2e-2), "self-attn mismatch"
    assert jnp.allclose(y_cross, ref_cross, atol=2e-2, rtol=2e-2), "cross-attn mismatch"

    print("KERNEL_OK")
</pallas_src>

<mosaic_0001>
module attributes {stable_mosaic.version = 11 : i64} {
  func.func @_matmul_kernel(%arg0: i32, %arg1: i32, %arg2: i32, %arg3: memref<32x32xf32, #tpu.memory_space<vmem>>, %arg4: memref<32x192xf32, #tpu.memory_space<vmem>>, %arg5: memref<32x192xf32, #tpu.memory_space<vmem>>, %arg6: memref<32x192xf32, #tpu.memory_space<vmem>>) attributes {dimension_semantics = [#tpu.dimension_semantics<parallel>, #tpu.dimension_semantics<parallel>, #tpu.dimension_semantics<arbitrary>], iteration_bounds = array<i64: 1, 1, 1>, scalar_prefetch = 0 : i64, scratch_operands = 1 : i64, tpu.core_type = #tpu.core_type<tc>, window_params = [{transform_indices = @transform_0, window_bounds = array<i64: 32, 32>}, {transform_indices = @transform_1, window_bounds = array<i64: 32, 192>}, {transform_indices = @transform_2, window_bounds = array<i64: 32, 192>}]} {
    %c0_i32 = arith.constant 0 : i32
    %0 = arith.cmpi eq, %arg2, %c0_i32 : i32
    %1 = arith.extui %0 : i1 to i32
    %c0_i32_0 = arith.constant 0 : i32
    %2 = arith.cmpi ne, %1, %c0_i32_0 : i32
    scf.if %2 {
      %cst_10 = arith.constant 0.000000e+00 : f32
      %12 = vector.broadcast %cst_10 : f32 to vector<32x192xf32>
      %c0_11 = arith.constant 0 : index
      %c0_12 = arith.constant 0 : index
      %13 = vector.load %arg6[%c0_11, %c0_12] : memref<32x192xf32, #tpu.memory_space<vmem>>, vector<32x192xf32>
      tpu.vector_store %arg6[%c0_11, %c0_12], %12 {strides = array<i32>} : memref<32x192xf32, #tpu.memory_space<vmem>>, vector<32x192xf32>,
    } else {
    }
    %c0 = arith.constant 0 : index
    %c0_1 = arith.constant 0 : index
    %3 = vector.load %arg6[%c0, %c0_1] : memref<32x192xf32, #tpu.memory_space<vmem>>, vector<32x192xf32>
    %c0_2 = arith.constant 0 : index
    %c0_3 = arith.constant 0 : index
    %4 = vector.load %arg3[%c0_2, %c0_3] : memref<32x32xf32, #tpu.memory_space<vmem>>, vector<32x32xf32>
    %c0_4 = arith.constant 0 : index
    %c0_5 = arith.constant 0 : index
    %5 = vector.load %arg4[%c0_4, %c0_5] : memref<32x192xf32, #tpu.memory_space<vmem>>, vector<32x192xf32>
    %cst = arith.constant dense<0.000000e+00> : vector<32x192xf32>
    %6 = tpu.matmul %4, %5, %cst {dimension_numbers = #tpu.dot_dimension_numbers<[1], [0], [0], [1], [0, 0, 1, 1], [], []>} : vector<32x32xf32>, vector<32x192xf32>, vector<32x192xf32> -> vector<32x192xf32>
    %7 = arith.addf %3, %6 : vector<32x192xf32>
    %c0_6 = arith.constant 0 : index
    %c0_7 = arith.constant 0 : index
    %8 = vector.load %arg6[%c0_6, %c0_7] : memref<32x192xf32, #tpu.memory_space<vmem>>, vector<32x192xf32>
    tpu.vector_store %arg6[%c0_6, %c0_7], %7 {strides = array<i32>} : memref<32x192xf32, #tpu.memory_space<vmem>>, vector<32x192xf32>,
    %c0_i32_8 = arith.constant 0 : i32
    %9 = arith.cmpi eq, %arg2, %c0_i32_8 : i32
    %10 = arith.extui %9 : i1 to i32
    %c0_i32_9 = arith.constant 0 : i32
    %11 = arith.cmpi ne, %10, %c0_i32_9 : i32
    scf.if %11 {
      %c0_10 = arith.constant 0 : index
      %c0_11 = arith.constant 0 : index
      %12 = vector.load %arg6[%c0_10, %c0_11] : memref<32x192xf32, #tpu.memory_space<vmem>>, vector<32x192xf32>
      %c0_12 = arith.constant 0 : index
      %c0_13 = arith.constant 0 : index
      %13 = vector.load %arg5[%c0_12, %c0_13] : memref<32x192xf32, #tpu.memory_space<vmem>>, vector<32x192xf32>
      tpu.vector_store %arg5[%c0_12, %c0_13], %12 {strides = array<i32>} : memref<32x192xf32, #tpu.memory_space<vmem>>, vector<32x192xf32>,
    } else {
    }
    return
  }
  func.func @transform_0(%arg0: i32, %arg1: i32, %arg2: i32) -> (i32, i32) {
    %c0_i32 = arith.constant 0 : i32
    return %arg0, %arg2 : i32, i32
  }
  func.func @transform_1(%arg0: i32, %arg1: i32, %arg2: i32) -> (i32, i32) {
    %c0_i32 = arith.constant 0 : i32
    return %arg2, %arg1 : i32, i32
  }
  func.func @transform_2(%arg0: i32, %arg1: i32, %arg2: i32) -> (i32, i32) {
    %c0_i32 = arith.constant 0 : i32
    return %arg0, %arg1 : i32, i32
  }
}

</mosaic_0001>

<llo_original>
// kernel: tpu_custom_call.1
$region0: #{tpu_custom_call.1}
  #allocation0 [shape = 'u32[]', space=smem, size = 0x4, offset = 0x4, fixed_abs, tag = 'smem constant byte address 0x4 - core index']
  #allocation1 [shape = 'u32[144,128]{1,0:T(1,128)}', space=vmem, size = 0x12000, scoped, tag = 'internal scratch']
  #allocation2 [shape = 'f32[32,192]{1,0:T(8,128)}', space=vmem, size = 0x8000, scoped, tag = 'scratch operand']
  %s0 = inlined_call_operand.hbm [shape: f32[32,32], index: 0, kind: input, shape index: {}]
  %s1 = inlined_call_operand.hbm [shape: f32[32,192], index: 1, kind: input, shape index: {}]
  %s2 = inlined_call_operand.hbm [shape: f32[32,192], index: 2, kind: output, shape index: {}]
  %s3 = sld [smem:[#allocation0]]
  $region34: #{tpu_custom_call.1} parent=0
    _
  %s5 = ssub.s32 1, %s3
  %s6 = scalar_select 0, %s5, %s3
  $region1: #{tpu_custom_call.1} parent=0
    #allocation3 [shape = 'u8[16384]{0}', space=vmem, size = 0x4000, scoped, tag = 'input window, operand 0, single buffered']
    #allocation4 [shape = 's32[1]{0}', space=sflag, size = 0x4, scoped, tag = 'scoped memory for tpu_custom_call.1']
    #allocation5 [shape = 's32[1]{0}', space=sflag, size = 0x4, scoped, tag = 'scoped memory for tpu_custom_call.1']
    #allocation6 [shape = 'u8[32768]{0}', space=vmem, size = 0x8000, scoped, tag = 'input window, operand 1, single buffered']
    #allocation7 [shape = 's32[1]{0}', space=sflag, size = 0x4, scoped, tag = 'scoped memory for tpu_custom_call.1']
    #allocation8 [shape = 'u8[32768]{0}', space=vmem, size = 0x8000, scoped, tag = 'output window, operand 0, single buffered']
    %7 = vsyncpa [#allocation4], 0
    %8 = vsyncpa [#allocation7], 0
    %9 = vsyncpa [#allocation5], 0
    // Predicated region
    $region2: #{tpu_custom_call.1} parent=1 // pred_check
      _
    $region3: #{tpu_custom_call.1} parent=1 // pred_check_branch
      %11 = sbr.rel (0) target = $region5
    $region4: #{tpu_custom_call.1} parent=1 // pred_region
      %s13 = ssub.s32 512, 512
      %14 = vsyncadd [#allocation4], %s13
      %s15 = sshll.u32 [#allocation3], 4
      %s16 = int_to_ptr.vmem [resolvable:$true] %s15
      %21 = dma.hbm_to_vmem [thread:$0]  %s0, 512, %s16, [#allocation4], 128, 128, 8
    $region5: #{tpu_custom_call.1} parent=1 // pred_fallthru
      _
    // Predicated region
    $region6: #{tpu_custom_call.1} parent=1 // pred_check
      _
    $region7: #{tpu_custom_call.1} parent=1 // pred_check_branch
      %23 = sbr.rel (0) target = $region9
    $region8: #{tpu_custom_call.1} parent=1 // pred_region
      %s25 = ssub.s32 1024, 1024
      %26 = vsyncadd [#allocation7], %s25
      %s27 = sshll.u32 [#allocation6], 4
      %s28 = int_to_ptr.vmem [resolvable:$true] %s27
      %33 = dma.hbm_to_vmem [thread:$0]  %s1, 1024, %s28, [#allocation7], 256, 256, 16
    $region9: #{tpu_custom_call.1} parent=1 // pred_fallthru
      _
    // Predicated region
    $region10: #{tpu_custom_call.1} parent=1 // pred_check
      _
    $region11: #{tpu_custom_call.1} parent=1 // pred_check_branch
      %35 = sbr.rel (0) target = $region13
    $region12: #{tpu_custom_call.1} parent=1 // pred_region
      %36 = dma.done [#allocation4], 512
    $region13: #{tpu_custom_call.1} parent=1 // pred_fallthru
      _
    // Predicated region
    $region14: #{tpu_custom_call.1} parent=1 // pred_check
      _
    $region15: #{tpu_custom_call.1} parent=1 // pred_check_branch
      %38 = sbr.rel (0) target = $region17
    $region16: #{tpu_custom_call.1} parent=1 // pred_region
      %39 = dma.done [#allocation7], 1024
    $region17: #{tpu_custom_call.1} parent=1 // pred_fallthru
      _
    %p40 = scmp.eq.s32.totalorder 0, 0
    // Predicated region
    $region18: #{tpu_custom_call.1} parent=1 // pred_check
      %p41 = pneg %p40
    $region19: #{tpu_custom_call.1} parent=1 // pred_check_branch
      %43 = sbr.rel (%p41) target = $region21
    $region20: #{tpu_custom_call.1} parent=1 // pred_region
      %44 = vst [vmem:[#allocation2] sm:$0xff] 0.0
      %vm45 = vcmask 523264
      %46 = vst.msk [vmem:[#allocation2 + $0x8] sm:$0xff] %vm45, 0.0
      %47 = vst [vmem:[#allocation2 + $0x10] sm:$0xff] 0.0
      %48 = vst.msk [vmem:[#allocation2 + $0x18] sm:$0xff] %vm45, 0.0
      %49 = vst [vmem:[#allocation2 + $0x20] sm:$0xff] 0.0
      %50 = vst.msk [vmem:[#allocation2 + $0x28] sm:$0xff] %vm45, 0.0
      %51 = vst [vmem:[#allocation2 + $0x30] sm:$0xff] 0.0
      %52 = vst.msk [vmem:[#allocation2 + $0x38] sm:$0xff] %vm45, 0.0
    $region21: #{tpu_custom_call.1} parent=1 // pred_fallthru
      _
    %v53 = vld [vmem:[#allocation2] sm:$0xff]
    %v54 = vld [vmem:[#allocation2 + $0x8] sm:$0xff]
    %v55 = vld [vmem:[#allocation2 + $0x10] sm:$0xff]
    %v56 = vld [vmem:[#allocation2 + $0x18] sm:$0xff]
    %v57 = vld [vmem:[#allocation2 + $0x20] sm:$0xff]
    %v58 = vld [vmem:[#allocation2 + $0x28] sm:$0xff]
    %v59 = vld [vmem:[#allocation2 + $0x30] sm:$0xff]
    %v60 = vld [vmem:[#allocation2 + $0x38] sm:$0xff]
    %v61 = vld [vmem:[#allocation3] sm:$0xff]
    %v62 = vld [vmem:[#allocation3 + $0x8] sm:$0xff]
    %v63 = vld [vmem:[#allocation3 + $0x10] sm:$0xff]
    %v64 = vld [vmem:[#allocation3 + $0x18] sm:$0xff]
    %v65 = vld [vmem:[#allocation6] sm:$0xff]
    %v66 = vld [vmem:[#allocation6 + $0x8] sm:$0xff]
    %v67 = vld [vmem:[#allocation6 + $0x10] sm:$0xff]
    %v68 = vld [vmem:[#allocation6 + $0x18] sm:$0xff]
    %v69 = vld [vmem:[#allocation6 + $0x20] sm:$0xff]
    %v70 = vld [vmem:[#allocation6 + $0x28] sm:$0xff]
    %v71 = vld [vmem:[#allocation6 + $0x30] sm:$0xff]
    %v72 = vld [vmem:[#allocation6 + $0x38] sm:$0xff]
    %vm73 = vcmask 261120
    %v75 = vsel %vm73, %v61, 0
    %v78 = vsel %vm73, %v62, 0
    %v81 = vsel %vm73, %v63, 0
    %v84 = vsel %vm73, %v64, 0
    %86 = vmatprep.subr.mxu0 %v66
    %87 = vmatpush1.msra.mxu0 %v65
    %88 = vmatprep.subr.mxu0 %v68
    %89 = vmatpush1.msra.mxu0 %v67
    %90 = vmatprep.subr.mxu0 %v70
    %91 = vmatpush1.msra.mxu0 %v69
    %92 = vmatprep.subr.mxu0 %v72
    %93 = vmatpush1.msra.mxu0 %v71
    %94 = vmatprep.subr.mxu0 0.0
    %95 = vmatpush1.msra.mxu0 0.0
    %96 = vmatprep.subr.mxu0 0.0
    %97 = vmatpush1.msra.mxu0 0.0
    %98 = vmatprep.subr.mxu0 0.0
    %99 = vmatpush1.msra.mxu0 0.0
    %100 = vmatprep.subr.mxu0 0.0
    %101 = vmatpush1.msra.mxu0 0.0
    %102 = vmatprep.subr.mxu0 0.0
    %103 = vmatpush1.msra.mxu0 0.0
    %104 = vmatprep.subr.mxu0 0.0
    %105 = vmatpush1.msra.mxu0 0.0
    %106 = vmatprep.subr.mxu0 0.0
    %107 = vmatpush1.msra.mxu0 0.0
    %108 = vmatprep.subr.mxu0 0.0
    %109 = vmatpush1.msra.mxu0 0.0
    %110 = vmatprep.subr.mxu0 0.0
    %111 = vmatpush1.msra.mxu0 0.0
    %112 = vmatprep.subr.mxu0 0.0
    %113 = vmatpush1.msra.mxu0 0.0
    %114 = vmatprep.subr.mxu0 0.0
    %115 = vmatpush1.msra.mxu0 0.0
    %116 = vmatprep.subr.mxu0 0.0
    %117 = vmatpush1.msra.mxu0 0.0
    %118 = vmatprep.subr.mxu0 0.0
    %119 = vmatpush1.msra.mxu0 0.0
    %120 = vmatprep.subr.mxu0 0.0
    %121 = vmatpush1.msra.mxu0 0.0
    %122 = vmatprep.subr.mxu0 0.0
    %123 = vmatpush1.msra.mxu0 0.0
    %124 = vmatprep.subr.mxu0 0.0
    %125 = vmatpush1.msra.mxu0 0.0
    %126 = vmatprep.subr.mxu0 0.0
    %127 = vmatpush1.msra.mxu0 0.0
    %128 = vmatprep.subr.mxu0 0.0
    %129 = vmatpush1.msra.mxu0 0.0
    %130 = vmatprep.subr.mxu0 0.0
    %131 = vmatpush1.msra.mxu0 0.0
    %132 = vmatprep.subr.mxu0 0.0
    %133 = vmatpush1.msra.mxu0 0.0
    %134 = vmatprep.subr.mxu0 0.0
    %135 = vmatpush1.msra.mxu0 0.0
    %136 = vmatprep.subr.mxu0 0.0
    %137 = vmatpush1.msra.mxu0 0.0
    %138 = vmatprep.subr.mxu0 0.0
    %139 = vmatpush1.msra.mxu0 0.0
    %140 = vmatprep.subr.mxu0 0.0
    %141 = vmatpush1.msra.mxu0 0.0
    %142 = vmatprep.subr.mxu0 0.0
    %143 = vmatpush1.msra.mxu0 0.0
    %144 = vmatprep.subr.mxu0 0.0
    %145 = vmatpush1.msra.mxu0 0.0
    %146 = vmatprep.subr.mxu0 0.0
    %147 = vmatpush1.msra.mxu0 0.0
    %148 = vmatprep.subr.mxu0 0.0
    %149 = vmatpush1.msra.mxu0 0.0
    %150 = vmatprep.mubr.f32.mxu0 0.0
    %151 = vmatmul.mubr.f32.gmra.mrb[0].mxu0 %v75
    %v152 = vpop.f32.mrb[0].mxu0
    %v153 = vadd.f32 0.0, %v152
    %v154 = vpop.f32.mrb[0].mxu0
    %v155 = vadd.f32 0.0, %v154
    %156 = vmatprep.mubr.f32.mxu0 0.0
    %157 = vmatmul.mubr.f32.gmra.mrb[0].mxu0 %v78
    %v158 = vpop.f32.mrb[0].mxu0
    %v159 = vadd.f32 0.0, %v158
    %v160 = vpop.f32.mrb[0].mxu0
    %v161 = vadd.f32 0.0, %v160
    %162 = vmatprep.mubr.f32.mxu0 0.0
    %163 = vmatmul.mubr.f32.gmra.mrb[0].mxu0 %v81
    %v164 = vpop.f32.mrb[0].mxu0
    %v165 = vadd.f32 0.0, %v164
    %v166 = vpop.f32.mrb[0].mxu0
    %v167 = vadd.f32 0.0, %v166
    %168 = vmatprep.mubr.f32.mxu0 0.0
    %169 = vmatmul.mubr.f32.gmra.mrb[0].mxu0 %v84
    %v170 = vpop.f32.mrb[0].mxu0
    %v171 = vadd.f32 0.0, %v170
    %v172 = vpop.f32.mrb[0].mxu0
    %v173 = vadd.f32 0.0, %v172
    %174 = vdwg.mxu0
    %v175 = vadd.f32 %v53, %v153
    %v176 = vadd.f32 %v54, %v155
    %v177 = vadd.f32 %v55, %v159
    %v178 = vadd.f32 %v56, %v161
    %v179 = vadd.f32 %v57, %v165
    %v180 = vadd.f32 %v58, %v167
    %v181 = vadd.f32 %v59, %v171
    %v182 = vadd.f32 %v60, %v173
    %183 = vst [vmem:[#allocation2] sm:$0xff] %v175
    %vm184 = vcmask 523264
    %185 = vst.msk [vmem:[#allocation2 + $0x8] sm:$0xff] %vm184, %v176
    %186 = vst [vmem:[#allocation2 + $0x10] sm:$0xff] %v177
    %187 = vst.msk [vmem:[#allocation2 + $0x18] sm:$0xff] %vm184, %v178
    %188 = vst [vmem:[#allocation2 + $0x20] sm:$0xff] %v179
    %189 = vst.msk [vmem:[#allocation2 + $0x28] sm:$0xff] %vm184, %v180
    %190 = vst [vmem:[#allocation2 + $0x30] sm:$0xff] %v181
    %191 = vst.msk [vmem:[#allocation2 + $0x38] sm:$0xff] %vm184, %v182
    // Predicated region
    $region22: #{tpu_custom_call.1} parent=1 // pred_check
      %p192 = pneg %p40
    $region23: #{tpu_custom_call.1} parent=1 // pred_check_branch
      %194 = sbr.rel (%p192) target = $region25
    $region24: #{tpu_custom_call.1} parent=1 // pred_region
      %v195 = vld [vmem:[#allocation2] sm:$0xff]
      %v196 = vld [vmem:[#allocation2 + $0x8] sm:$0xff]
      %v197 = vld [vmem:[#allocation2 + $0x10] sm:$0xff]
      %v198 = vld [vmem:[#allocation2 + $0x18] sm:$0xff]
      %v199 = vld [vmem:[#allocation2 + $0x20] sm:$0xff]
      %v200 = vld [vmem:[#allocation2 + $0x28] sm:$0xff]
      %v201 = vld [vmem:[#allocation2 + $0x30] sm:$0xff]
      %v202 = vld [vmem:[#allocation2 + $0x38] sm:$0xff]
      %203 = vst [vmem:[#allocation8] sm:$0xff] %v195
      %204 = vst.msk [vmem:[#allocation8 + $0x8] sm:$0xff] %vm184, %v196
      %205 = vst [vmem:[#allocation8 + $0x10] sm:$0xff] %v197
      %206 = vst.msk [vmem:[#allocation8 + $0x18] sm:$0xff] %vm184, %v198
      %207 = vst [vmem:[#allocation8 + $0x20] sm:$0xff] %v199
      %208 = vst.msk [vmem:[#allocation8 + $0x28] sm:$0xff] %vm184, %v200
      %209 = vst [vmem:[#allocation8 + $0x30] sm:$0xff] %v201
      %210 = vst.msk [vmem:[#allocation8 + $0x38] sm:$0xff] %vm184, %v202
    $region25: #{tpu_custom_call.1} parent=1 // pred_fallthru
      _
    // Predicated region
    $region26: #{tpu_custom_call.1} parent=1 // pred_check
      _
    $region27: #{tpu_custom_call.1} parent=1 // pred_check_branch
      %212 = sbr.rel (0) target = $region29
    $region28: #{tpu_custom_call.1} parent=1 // pred_region
      %s214 = ssub.s32 1024, 1024
      %215 = vsyncadd [#allocation5], %s214
      %s216 = sshll.u32 [#allocation8], 4
      %s217 = int_to_ptr.vmem [resolvable:$true] %s216
      %222 = dma.vmem_to_hbm [thread:$0]  %s217, 1024, %s2, [#allocation5], 256, 256, 16
    $region29: #{tpu_custom_call.1} parent=1 // pred_fallthru
      _
    // Predicated region
    $region30: #{tpu_custom_call.1} parent=1 // pred_check
      _
    $region31: #{tpu_custom_call.1} parent=1 // pred_check_branch
      %224 = sbr.rel (0) target = $region33
    $region32: #{tpu_custom_call.1} parent=1 // pred_region
      %225 = dma.done [#allocation5], 1024
    $region33: #{tpu_custom_call.1} parent=1 // pred_fallthru
      _
    %226 = vsyncpa [#allocation4], 1
    %227 = vsyncpa [#allocation7], 1
    %228 = vsyncpa [#allocation5], 1

</llo_original>
